<compile_context>
chip_gen: v6e
topology: v6e:2x2x1
jax: 0.10.0
libtpu: 0.0.40
codegen_flags: <defaults>
</compile_context>

<pallas_src>
import functools

import jax
import jax.numpy as jnp
from jax import lax
from jax.experimental import pallas as pl
from jax.experimental.pallas import tpu as pltpu


def _round_up(a: int, b: int) -> int:
    return (a + b - 1) // b * b


def _precise_rsqrt(a):
    # EUP rsqrt + one Newton-Raphson step: relative error ~1e-7, far under 1e-4 tol,
    # and the factor is only (rows, 1) so the refinement is cheap.
    r = lax.rsqrt(a)
    return r * (1.5 - 0.5 * a * r * r)


def _stats_kernel(x_ref, stats_ref, *, tile_n, tiles_per_chunk, n_rows,
                  with_sq, needs_mask):
    """Pass 1: accumulate per-column sum (and sum-of-squares for PN) for one chunk."""
    c = pl.program_id(0)          # chunk (parallel)
    t = pl.program_id(1)          # tile within chunk (reduction, output resident)

    @pl.when(t == 0)
    def _():
        stats_ref[...] = jnp.zeros_like(stats_ref)

    x = x_ref[...].astype(jnp.float32)

    if needs_mask:
        # Rows past the true N (ragged last tile / clamped virtual tiles) read
        # unspecified data; zero them so the statistics stay exact.
        row_start = (c * tiles_per_chunk + t) * tile_n
        row_ids = row_start + lax.broadcasted_iota(jnp.int32, (x.shape[0], 1), 0)
        x = jnp.where(row_ids < n_rows, x, 0.0)

    s = jnp.sum(x, axis=0, keepdims=True)                  # (1, D) column sums
    if with_sq:
        q = jnp.sum(x * x, axis=0, keepdims=True)          # (1, D) column sq-sums
        upd = jnp.concatenate([s, q], axis=0)              # (2, D)
    else:
        upd = s                                            # (1, D)
    stats_ref[...] += upd[None]                            # (1, num_stats, D)


def _normalize_kernel(params_ref, x_ref, o_ref, *, mode, scale):
    """Pass 2: normalize one (tile_n, D) row tile using precomputed global params."""
    x = x_ref[...].astype(jnp.float32)
    col_mean = params_ref[0:1, :]                          # (1, D)

    if mode == "PN":
        inv = params_ref[1:2, :]                           # global scalar (scale folded)
        out = (x - col_mean) * inv
    elif mode == "PN-SI":
        xc = x - col_mean
        row_sq = jnp.sum(xc * xc, axis=1, keepdims=True)   # (tile_n, 1)
        out = xc * (scale * _precise_rsqrt(1e-6 + row_sq))
    else:  # PN-SCS
        row_sq = jnp.sum(x * x, axis=1, keepdims=True)     # (tile_n, 1)
        out = x * (scale * _precise_rsqrt(1e-6 + row_sq)) - col_mean

    o_ref[...] = out.astype(o_ref.dtype)


def pair_norm(x: jax.Array, mode: str = "PN", scale: float = 1.0,
              max_row_tile: int = 4096) -> jax.Array:
    """PairNormLayer.forward. x: [N, D] (graph nodes x feature channels)."""
    assert mode in ["None", "PN", "PN-SI", "PN-SCS"]
    assert x.ndim == 2
    if mode == "None":
        return x

    N, D = x.shape
    sub = 16 if x.dtype == jnp.bfloat16 else 8             # sublane packing
    d_lane = _round_up(D, 128)                              # VMEM lane footprint only

    # Row tile: let the byte budget (not a small row cap) be binding so the ~0.35 us
    # per-step pipeline overhead is amortized (review item 1).
    budget_bytes = 4 * 1024 * 1024
    rows_budget = max(sub, (budget_bytes // (d_lane * 4)) // sub * sub)
    tile_n = max(sub, min(_round_up(max_row_tile, sub), rows_budget, _round_up(N, sub)))
    num_tiles = pl.cdiv(N, tile_n)

    # Shard the pass-1 reduction across 2 super-chunks (v7x: one per TensorCore).
    num_chunks = 2 if num_tiles >= 4 else 1
    tiles_per_chunk = pl.cdiv(num_tiles, num_chunks)
    needs_mask = (N % tile_n != 0) or (num_chunks * tiles_per_chunk != num_tiles)

    with_sq = (mode == "PN")
    num_stats = 2 if with_sq else 1

    # Explicit VMEM limit: double-buffered in + out tiles + f32 temps + headroom,
    # clamped to a range that is safe on v5e/v6e (128 MiB phys) and v7x (64 MiB phys).
    tile_in_bytes = tile_n * d_lane * x.dtype.itemsize
    tile_f32_bytes = tile_n * d_lane * 4
    est = 4 * tile_in_bytes + 2 * tile_f32_bytes + 4 * (num_stats + 2) * d_lane * 4
    vmem_limit = int(min(48 << 20, max(32 << 20, est + (6 << 20))))

    # ---- pass 1: per-chunk partial column statistics --------------------------
    stats_kernel = functools.partial(
        _stats_kernel, tile_n=tile_n, tiles_per_chunk=tiles_per_chunk,
        n_rows=N, with_sq=with_sq, needs_mask=needs_mask)

    def _x_stats_map(c, t):
        # Clamp virtual tiles (ragged chunk split) onto the last real block; the
        # in-kernel row mask zeroes their contribution.
        return (jnp.minimum(c * tiles_per_chunk + t, num_tiles - 1), 0)

    partials = pl.pallas_call(
        stats_kernel,
        out_shape=jax.ShapeDtypeStruct((num_chunks, num_stats, D), jnp.float32),
        grid=(num_chunks, tiles_per_chunk),
        in_specs=[pl.BlockSpec((tile_n, D), _x_stats_map)],
        out_specs=pl.BlockSpec((1, num_stats, D), lambda c, t: (c, 0, 0)),
        compiler_params=pltpu.CompilerParams(
            dimension_semantics=("parallel", "arbitrary"),
            vmem_limit_bytes=vmem_limit),
    )(x)

    # ---- tiny glue: combine partials, hoist stats post-processing -------------
    sums = partials.sum(axis=0)                             # (num_stats, D)
    col_mean = sums[0] * (1.0 / N)                          # (D,)
    if with_sq:
        # Note: PN's global scalar uses the variance identity sum_d(E[x^2]-E[x]^2);
        # fine in f32 for typical feature scales (clamped at 0 defensively).
        col_sq_mean = sums[1] * (1.0 / N)
        var_sum = jnp.maximum(jnp.sum(col_sq_mean - col_mean * col_mean), 0.0)
        g = scale / jnp.sqrt(1e-6 + var_sum)                # scalar, scale folded
        params = jnp.stack([col_mean, jnp.broadcast_to(g, col_mean.shape)], axis=0)
    else:
        params = col_mean[None, :]
    num_params = params.shape[0]

    # ---- pass 2: streamed, pipelined normalization -----------------------------
    norm_kernel = functools.partial(_normalize_kernel, mode=mode, scale=float(scale))
    out = pl.pallas_call(
        norm_kernel,
        out_shape=jax.ShapeDtypeStruct((N, D), x.dtype),
        grid=(num_tiles,),
        in_specs=[pl.BlockSpec((num_params, D), lambda i: (0, 0)),
                  pl.BlockSpec((tile_n, D), lambda i: (i, 0))],
        out_specs=pl.BlockSpec((tile_n, D), lambda i: (i, 0)),
        compiler_params=pltpu.CompilerParams(
            dimension_semantics=("parallel",),
            vmem_limit_bytes=vmem_limit),
    )(params, x)
    return out


def _pair_norm_ref(x, mode="PN", scale=1.0):
    # Pure-JAX reference mirroring the PyTorch forward exactly.
    if mode == "None":
        return x
    xf = x.astype(jnp.float32)
    col_mean = xf.mean(axis=0)
    if mode == "PN":
        xc = xf - col_mean
        rownorm_mean = jnp.sqrt(1e-6 + jnp.mean(jnp.sum(xc ** 2, axis=1)))
        return (scale * xc / rownorm_mean).astype(x.dtype)
    if mode == "PN-SI":
        xc = xf - col_mean
        rownorm_ind = jnp.sqrt(1e-6 + jnp.sum(xc ** 2, axis=1, keepdims=True))
        return (scale * xc / rownorm_ind).astype(x.dtype)
    if mode == "PN-SCS":
        rownorm_ind = jnp.sqrt(1e-6 + jnp.sum(xf ** 2, axis=1, keepdims=True))
        return (scale * xf / rownorm_ind - col_mean).astype(x.dtype)
    return x


if __name__ == "__main__":
    key = jax.random.PRNGKey(0)
    ok = True
    # (N, D, max_row_tile): second case forces a small tile so the multi-tile,
    # dual-chunk, ragged-row and D%128!=0 code paths are all exercised.
    cases = [(32, 64, 4096), (600, 96, 128)]
    for (N, D, mrt) in cases:
        key, sub_key = jax.random.split(key)
        x = jax.random.normal(sub_key, (N, D), dtype=jnp.float32)
        for mode in ["PN", "PN-SI", "PN-SCS", "None"]:
            out = jax.block_until_ready(pair_norm(x, mode=mode, scale=1.0,
                                                  max_row_tile=mrt))
            ref = _pair_norm_ref(x, mode=mode, scale=1.0)
            err = float(jnp.max(jnp.abs(out - ref)))
            if out.shape != x.shape or not bool(jnp.all(jnp.isfinite(out))) or err > 1e-4:
                ok = False
                print(f"FAIL N={N} D={D} mode={mode} max abs err={err} shape={out.shape}")
    if ok:
        print("KERNEL_OK")
</pallas_src>

<mosaic_0001>
module attributes {stable_mosaic.version = 11 : i64} {
  func.func @_stats_kernel(%arg0: i32, %arg1: i32, %arg2: memref<32x64xf32, #tpu.memory_space<vmem>>, %arg3: memref<1x2x64xf32, #tpu.memory_space<vmem>>) attributes {dimension_semantics = [#tpu.dimension_semantics<parallel>, #tpu.dimension_semantics<arbitrary>], iteration_bounds = array<i64: 1, 1>, scalar_prefetch = 0 : i64, scratch_operands = 0 : i64, tpu.core_type = #tpu.core_type<tc>, window_params = [{transform_indices = @transform_0, window_bounds = array<i64: 32, 64>}, {transform_indices = @transform_1, window_bounds = array<i64: 1, 2, 64>}]} {
    %c0_i32 = arith.constant 0 : i32
    %0 = arith.cmpi eq, %arg1, %c0_i32 : i32
    %1 = arith.extui %0 : i1 to i32
    %c0_i32_0 = arith.constant 0 : i32
    %2 = arith.cmpi ne, %1, %c0_i32_0 : i32
    scf.if %2 {
      %cst_9 = arith.constant 0.000000e+00 : f32
      %14 = vector.broadcast %cst_9 : f32 to vector<1x2x64xf32>
      %c0_10 = arith.constant 0 : index
      %c0_11 = arith.constant 0 : index
      %c0_12 = arith.constant 0 : index
      %15 = vector.load %arg3[%c0_10, %c0_11, %c0_12] : memref<1x2x64xf32, #tpu.memory_space<vmem>>, vector<1x2x64xf32>
      tpu.vector_store %arg3[%c0_10, %c0_11, %c0_12], %14 {strides = array<i32>} : memref<1x2x64xf32, #tpu.memory_space<vmem>>, vector<1x2x64xf32>,
    } else {
    }
    %c0 = arith.constant 0 : index
    %c0_1 = arith.constant 0 : index
    %3 = vector.load %arg2[%c0, %c0_1] : memref<32x64xf32, #tpu.memory_space<vmem>>, vector<32x64xf32>
    %cst = arith.constant dense<0.000000e+00> : vector<64xf32>
    %4 = vector.multi_reduction <add>, %3, %cst [0] : vector<32x64xf32> to vector<64xf32>
    %5 = vector.shape_cast %4 : vector<64xf32> to vector<1x64xf32>
    %6 = arith.mulf %3, %3 : vector<32x64xf32>
    %cst_2 = arith.constant dense<0.000000e+00> : vector<64xf32>
    %7 = vector.multi_reduction <add>, %6, %cst_2 [0] : vector<32x64xf32> to vector<64xf32>
    %8 = vector.shape_cast %7 : vector<64xf32> to vector<1x64xf32>
    %9 = tpu.concatenate %5, %8 in 0 : vector<1x64xf32>, vector<1x64xf32> -> vector<2x64xf32>
    %c0_3 = arith.constant 0 : index
    %c0_4 = arith.constant 0 : index
    %c0_5 = arith.constant 0 : index
    %10 = vector.load %arg3[%c0_3, %c0_4, %c0_5] : memref<1x2x64xf32, #tpu.memory_space<vmem>>, vector<1x2x64xf32>
    %11 = vector.shape_cast %9 : vector<2x64xf32> to vector<1x2x64xf32>
    %12 = arith.addf %10, %11 : vector<1x2x64xf32>
    %c0_6 = arith.constant 0 : index
    %c0_7 = arith.constant 0 : index
    %c0_8 = arith.constant 0 : index
    %13 = vector.load %arg3[%c0_6, %c0_7, %c0_8] : memref<1x2x64xf32, #tpu.memory_space<vmem>>, vector<1x2x64xf32>
    tpu.vector_store %arg3[%c0_6, %c0_7, %c0_8], %12 {strides = array<i32>} : memref<1x2x64xf32, #tpu.memory_space<vmem>>, vector<1x2x64xf32>,
    return
  }
  func.func @transform_0(%arg0: i32, %arg1: i32) -> (i32, i32) {
    %c1_i32 = arith.constant 1 : i32
    %0 = arith.muli %arg0, %c1_i32 : i32
    %1 = arith.addi %0, %arg1 : i32
    %c0_i32 = arith.constant 0 : i32
    %2 = arith.minsi %1, %c0_i32 : i32
    %c0_i32_0 = arith.constant 0 : i32
    %c0_i32_1 = arith.constant 0 : i32
    return %2, %c0_i32_0 : i32, i32
  }
  func.func @transform_1(%arg0: i32, %arg1: i32) -> (i32, i32, i32) {
    %c0_i32 = arith.constant 0 : i32
    %c0_i32_0 = arith.constant 0 : i32
    %c0_i32_1 = arith.constant 0 : i32
    return %arg0, %c0_i32, %c0_i32_0 : i32, i32, i32
  }
}

</mosaic_0001>

<llo_original>
// kernel: tpu_custom_call.1
$region0: #{tpu_custom_call.1}
  #allocation0 [shape = 'u32[]', space=smem, size = 0x4, offset = 0x4, fixed_abs, tag = 'smem constant byte address 0x4 - core index']
  #allocation1 [shape = 'u32[144,128]{1,0:T(1,128)}', space=vmem, size = 0x12000, scoped, tag = 'internal scratch']
  %s0 = inlined_call_operand.hbm [shape: f32[32,64], index: 0, kind: input, shape index: {}]
  %s1 = inlined_call_operand.hbm [shape: f32[1,2,64], index: 1, kind: output, shape index: {}]
  %s2 = sld [smem:[#allocation0]]
  $region22: #{tpu_custom_call.1} parent=0
    _
  %s4 = ssub.s32 1, %s2
  %s5 = scalar_select 0, %s4, %s2
  $region1: #{tpu_custom_call.1} parent=0
    #allocation2 [shape = 'u8[16384]{0}', space=vmem, size = 0x4000, scoped, tag = 'input window, operand 0, single buffered']
    #allocation3 [shape = 's32[1]{0}', space=sflag, size = 0x4, scoped, tag = 'scoped memory for tpu_custom_call.1']
    #allocation4 [shape = 's32[1]{0}', space=sflag, size = 0x4, scoped, tag = 'scoped memory for tpu_custom_call.1']
    #allocation5 [shape = 'u8[1024]{0}', space=vmem, size = 0x400, scoped, tag = 'output window, operand 0, single buffered']
    %6 = vsyncpa [#allocation3], 0
    %7 = vsyncpa [#allocation4], 0
    // Predicated region
    $region2: #{tpu_custom_call.1} parent=1 // pred_check
      _
    $region3: #{tpu_custom_call.1} parent=1 // pred_check_branch
      %9 = sbr.rel (0) target = $region5
    $region4: #{tpu_custom_call.1} parent=1 // pred_region
      %s10 = sadd.s32 0, 0
      %p11 = scmp.lt.s32.totalorder %s10, 0
      %s12 = scalar_select %p11, %s10, 0
      %s13 = smul.u32 4, %s12
      %s15 = ssub.s32 512, 512
      %16 = vsyncadd [#allocation3], %s15
      %s17 = smul.addr %s13, 128
      %s18 = scalar_lea.hbm %s0, %s17
      %s19 = sshll.u32 [#allocation2], 4
      %s20 = int_to_ptr.vmem [resolvable:$true] %s19
      %25 = dma.hbm_to_vmem [thread:$0]  %s18, 512, %s20, [#allocation3], 128, 128, 8
    $region5: #{tpu_custom_call.1} parent=1 // pred_fallthru
      _
    // Predicated region
    $region6: #{tpu_custom_call.1} parent=1 // pred_check
      _
    $region7: #{tpu_custom_call.1} parent=1 // pred_check_branch
      %27 = sbr.rel (0) target = $region9
    $region8: #{tpu_custom_call.1} parent=1 // pred_region
      %28 = dma.done [#allocation3], 512
    $region9: #{tpu_custom_call.1} parent=1 // pred_fallthru
      _
    %s29 = sadd.s32 0, 0
    %p30 = scmp.lt.s32.totalorder %s29, 0
    %s31 = scalar_select %p30, %s29, 0
    %s32 = smul.u32 4, %s31
    %p33 = scmp.eq.s32.totalorder 0, 0
    // Predicated region
    $region10: #{tpu_custom_call.1} parent=1 // pred_check
      %p34 = pneg %p33
    $region11: #{tpu_custom_call.1} parent=1 // pred_check_branch
      %36 = sbr.rel (%p34) target = $region13
    $region12: #{tpu_custom_call.1} parent=1 // pred_region
      %vm37 = vcmask 517120
      %38 = vst.msk [vmem:[#allocation5] sm:$0x3] %vm37, 0.0
    $region13: #{tpu_custom_call.1} parent=1 // pred_fallthru
      _
    %v39 = vld [vmem:[#allocation2] sm:$0xff]
    %v40 = vld [vmem:[#allocation2 + $0x8] sm:$0xff]
    %v41 = vld [vmem:[#allocation2 + $0x10] sm:$0xff]
    %v42 = vld [vmem:[#allocation2 + $0x18] sm:$0xff]
    %vm43 = vcmask 523264
    %v44 = vsel %vm43, %v39, 0.0
    %v45 = vsel %vm43, %v40, 0.0
    %v46 = vadd.f32 %v44, %v45
    %v47 = vsel %vm43, %v41, 0.0
    %v48 = vadd.f32 %v46, %v47
    %v49 = vsel %vm43, %v42, 0.0
    %v50 = vadd.f32 %v48, %v49
    %v51 = vrot.slane %v50, 4
    %v52 = vadd.f32 %v50, %v51
    %v53 = vrot.slane %v52, 2
    %v54 = vadd.f32 %v52, %v53
    %v55 = vrot.slane %v54, 1
    %v56 = vadd.f32 %v54, %v55
    %v57 = vmul.f32 %v39, %v39
    %v58 = vmul.f32 %v40, %v40
    %v59 = vmul.f32 %v41, %v41
    %v60 = vmul.f32 %v42, %v42
    %v61 = vsel %vm43, %v57, 0.0
    %v62 = vsel %vm43, %v58, 0.0
    %v63 = vadd.f32 %v61, %v62
    %v64 = vsel %vm43, %v59, 0.0
    %v65 = vadd.f32 %v63, %v64
    %v66 = vsel %vm43, %v60, 0.0
    %v67 = vadd.f32 %v65, %v66
    %v68 = vrot.slane %v67, 4
    %v69 = vadd.f32 %v67, %v68
    %v70 = vrot.slane %v69, 2
    %v71 = vadd.f32 %v69, %v70
    %v72 = vrot.slane %v71, 1
    %v73 = vadd.f32 %v71, %v72
    %vm74 = vcmask 1040384
    %v75 = vsel %vm74, %v56, %v73
    %v76 = vld [vmem:[#allocation5] sm:$0x3]
    %v77 = vadd.f32 %v76, %v75
    %vm78 = vcmask 517120
    %79 = vst.msk [vmem:[#allocation5] sm:$0x3] %vm78, %v77
    // Predicated region
    $region14: #{tpu_custom_call.1} parent=1 // pred_check
      _
    $region15: #{tpu_custom_call.1} parent=1 // pred_check_branch
      %81 = sbr.rel (0) target = $region17
    $region16: #{tpu_custom_call.1} parent=1 // pred_region
      %s83 = ssub.s32 32, 32
      %84 = vsyncadd [#allocation4], %s83
      %s86 = sshll.u32 [#allocation5], 4
      %s87 = int_to_ptr.vmem [resolvable:$true] %s86
      %89 = dma.vmem_to_hbm [thread:$0]  %s87, 32, %s1, [#allocation4]
    $region17: #{tpu_custom_call.1} parent=1 // pred_fallthru
      _
    // Predicated region
    $region18: #{tpu_custom_call.1} parent=1 // pred_check
      _
    $region19: #{tpu_custom_call.1} parent=1 // pred_check_branch
      %91 = sbr.rel (0) target = $region21
    $region20: #{tpu_custom_call.1} parent=1 // pred_region
      %92 = dma.done [#allocation4], 32
    $region21: #{tpu_custom_call.1} parent=1 // pred_fallthru
      _
    %93 = vsyncpa [#allocation3], 1
    %94 = vsyncpa [#allocation4], 1

</llo_original>
